<compile_context>
chip_gen: v7x
topology: tpu7x:2x2x1
jax: 0.10.0
libtpu: 0.0.40
codegen_flags: <defaults>
</compile_context>

<pallas_src>
import functools

import jax
import jax.numpy as jnp
from jax.experimental import pallas as pl
from jax.experimental.pallas import tpu as pltpu


def _round_up(x, m):
    return ((x + m - 1) // m) * m


def _cdiv(a, b):
    return (a + b - 1) // b


def _bf16_vpu_native():
    # v6e / v7x have a bf16-native VPU; v5e (and older) do not.
    try:
        kind = jax.devices()[0].device_kind.lower()
    except Exception:  # pragma: no cover - no device available
        return False
    return ("v6" in kind) or ("v7" in kind)


_BF16_VPU = _bf16_vpu_native()


def _actor_kernel(obs_ref,
                  w1_ref, b1_ref,
                  w2_ref, b2_ref,
                  w3_ref, b3_ref,
                  w4_ref, b4_ref,
                  out_ref,
                  *, relu_dtype):
    # Entire 4-layer MLP hot path runs inside the kernel on the MXU/VPU/EUP.
    # Matmul operands may be bf16; accumulation + bias add are always f32.
    # relu runs in relu_dtype (bf16 on v6e/v7x, f32 on v5e / f32 path); tanh is f32.
    def hidden_layer(x, w_ref, b_ref):
        h = jnp.dot(x, w_ref[...], preferred_element_type=jnp.float32) + b_ref[...]
        h = jnp.maximum(h.astype(relu_dtype), 0.0)
        return h.astype(w_ref.dtype)

    h = hidden_layer(obs_ref[...], w1_ref, b1_ref)
    h = hidden_layer(h, w2_ref, b2_ref)
    h = hidden_layer(h, w3_ref, b3_ref)
    h = jnp.dot(h, w4_ref[...], preferred_element_type=jnp.float32) + b4_ref[...]
    out_ref[...] = jnp.tanh(h).astype(out_ref.dtype)


def _plan_batch(B, batch_tile, sublane, *, cap=2048, megacore_min_batch=256):
    """Pick (batch_tile, padded_B) so the tile divides the padded batch exactly."""
    if batch_tile is not None:
        assert batch_tile % sublane == 0, (
            f"batch_tile must be a multiple of {sublane} for this matmul dtype")
        return batch_tile, _round_up(B, batch_tile)

    # Work in sublane-row units; pad the batch only up to the sublane multiple,
    # then size the tile so it divides the (lightly) padded batch.
    n_units = _cdiv(_round_up(B, sublane), sublane)
    max_tile_units = max(cap // sublane, 1)
    num_steps = _cdiv(n_units, max_tile_units)
    if B > megacore_min_batch:
        # Guarantee >= 2 grid steps so both v7x TensorCores get work
        # (dimension_semantics=("parallel",) shards the batch axis across TCs).
        num_steps = max(num_steps, 2)
    tile_units = _cdiv(n_units, num_steps)
    batch_tile = tile_units * sublane
    return batch_tile, num_steps * batch_tile


@functools.partial(jax.jit, static_argnames=("batch_tile", "matmul_dtype"))
def actor_forward(obs, params, *, batch_tile=None, matmul_dtype=jnp.bfloat16):
    """Run the Actor forward pass with a Pallas TPU kernel.

    obs: (B, dim_obs) float32
    params: dict with w1..w4 of shape (in, out) f32 and b1..b4 of shape (1, out) f32
    batch_tile: rows per grid step (multiple of 16 for bf16, 8 for f32).
                Default: auto (cap 2048, exact divisor of the padded batch,
                >= 2 grid steps when B > 256 for v7x megacore).
    matmul_dtype: dtype of matmul operands (bf16 default, f32 for exact results);
                  accumulation, bias add and tanh are always f32.
    """
    B, dim_obs = obs.shape
    dim_act = params["w4"].shape[1]

    is_bf16 = jnp.dtype(matmul_dtype) == jnp.dtype(jnp.bfloat16)
    sublane = 16 if is_bf16 else 8
    batch_tile, b_pad = _plan_batch(B, batch_tile, sublane)

    # Pad batch only up to the (small) required multiple; slice it back off at the end.
    # Padded rows produce tanh(bias-chain) values which are discarded by the slice.
    if b_pad != B:
        obs = jnp.pad(obs, ((0, b_pad - B), (0, 0)))

    obs_c = obs.astype(matmul_dtype)
    ws = [params[f"w{i}"].astype(matmul_dtype) for i in range(1, 5)]
    bs = [params[f"b{i}"].astype(jnp.float32) for i in range(1, 5)]

    # relu in bf16 only where the VPU is bf16-native (v6e/v7x); f32 elsewhere.
    relu_dtype = matmul_dtype if (is_bf16 and _BF16_VPU) else jnp.float32

    grid = (b_pad // batch_tile,)

    # obs / out are tiled along batch; weights & biases are replicated (block index
    # constant across grid steps, so they stay resident in VMEM). Their default
    # double-buffering costs ~120 KB total -> not worth Buffered(1) today.
    def replicated(arr):
        return pl.BlockSpec(arr.shape, lambda i: (0, 0))

    in_specs = [pl.BlockSpec((batch_tile, dim_obs), lambda i: (i, 0))]
    for w, b in zip(ws, bs):
        in_specs.append(replicated(w))
        in_specs.append(replicated(b))

    out_spec = pl.BlockSpec((batch_tile, dim_act), lambda i: (i, 0))

    kernel = functools.partial(_actor_kernel, relu_dtype=relu_dtype)

    out = pl.pallas_call(
        kernel,
        out_shape=jax.ShapeDtypeStruct((b_pad, dim_act), jnp.float32),
        grid_spec=pltpu.PrefetchScalarGridSpec(
            num_scalar_prefetch=0,
            grid=grid,
            in_specs=in_specs,
            out_specs=out_spec,
        ),
        compiler_params=pltpu.CompilerParams(
            # batch axis is embarrassingly parallel -> megacore sharding on v7x.
            dimension_semantics=("parallel",),
        ),
    )(obs_c,
      ws[0], bs[0],
      ws[1], bs[1],
      ws[2], bs[2],
      ws[3], bs[3])

    return out[:B] if b_pad != B else out


def init_actor_params(key, dim_obs, dim_act, hidden=64):
    """Deterministic synthetic parameters matching the torch Actor shapes.

    torch nn.Linear(in, out) weight is (out, in); we store its transpose (in, out)
    so the kernel computes x @ W + b, identical semantics to x @ W_torch.T + b.
    """
    dims = [(dim_obs, hidden * 2),
            (hidden * 2, hidden * 2),
            (hidden * 2, hidden),
            (hidden, dim_act)]
    params = {}
    for idx, (din, dout) in enumerate(dims, start=1):
        key, kw, kb = jax.random.split(key, 3)
        bound = 1.0 / jnp.sqrt(jnp.float32(din))  # same scale as torch default init
        params[f"w{idx}"] = jax.random.uniform(
            kw, (din, dout), jnp.float32, minval=-bound, maxval=bound)
        params[f"b{idx}"] = jax.random.uniform(
            kb, (1, dout), jnp.float32, minval=-bound, maxval=bound)
    return params


def actor_reference(obs, params):
    x = jnp.maximum(obs @ params["w1"] + params["b1"], 0.0)
    x = jnp.maximum(x @ params["w2"] + params["b2"], 0.0)
    x = jnp.maximum(x @ params["w3"] + params["b3"], 0.0)
    return jnp.tanh(x @ params["w4"] + params["b4"])


if __name__ == "__main__":
    key = jax.random.PRNGKey(0)
    dim_obs, dim_act, hidden = 32, 8, 64

    key, k_params = jax.random.split(key, 2)
    params = init_actor_params(k_params, dim_obs, dim_act, hidden)

    # 1) Small f32 run — exact match with the torch module semantics.
    key, k_obs = jax.random.split(key, 2)
    obs_small = jax.random.normal(k_obs, (8, dim_obs), jnp.float32)
    out_small = jax.block_until_ready(
        actor_forward(obs_small, params, matmul_dtype=jnp.float32))
    ref_small = actor_reference(obs_small, params)
    assert out_small.shape == (8, dim_act)
    assert jnp.allclose(out_small, ref_small, atol=1e-5, rtol=1e-5), "f32 mismatch"

    # 2) Default path: bf16 matmul operands, auto tiling, ragged batch (40 rows pads
    #    to 48 = one 16-aligned tile). Looser tolerance for bf16 operand rounding.
    key, k_obs2 = jax.random.split(key, 2)
    obs_ragged = jax.random.normal(k_obs2, (40, dim_obs), jnp.float32)
    out_ragged = jax.block_until_ready(actor_forward(obs_ragged, params))
    ref_ragged = actor_reference(obs_ragged, params)
    assert out_ragged.shape == (40, dim_act)
    assert jnp.allclose(out_ragged, ref_ragged, atol=2e-2, rtol=2e-2), "bf16 mismatch"

    # 3) Explicit multi-step grid (pipelined obs/out DMA) with bf16 operands.
    key, k_obs3 = jax.random.split(key, 2)
    obs_big = jax.random.normal(k_obs3, (64, dim_obs), jnp.float32)
    out_big = jax.block_until_ready(
        actor_forward(obs_big, params, batch_tile=16, matmul_dtype=jnp.bfloat16))
    ref_big = actor_reference(obs_big, params)
    assert out_big.shape == (64, dim_act)
    assert jnp.allclose(out_big, ref_big, atol=2e-2, rtol=2e-2), "bf16 tiled mismatch"

    # 4) Auto plan with B > 256 -> grid forced to >= 2 steps (v7x megacore path).
    key, k_obs4 = jax.random.split(key, 2)
    obs_mc = jax.random.normal(k_obs4, (300, dim_obs), jnp.float32)
    out_mc = jax.block_until_ready(actor_forward(obs_mc, params))
    ref_mc = actor_reference(obs_mc, params)
    assert out_mc.shape == (300, dim_act)
    assert jnp.allclose(out_mc, ref_mc, atol=2e-2, rtol=2e-2), "megacore-path mismatch"

    print("KERNEL_OK")
</pallas_src>

<mosaic_0001>
module attributes {stable_mosaic.version = 11 : i64} {
  func.func @_actor_kernel(%arg0: i32, %arg1: memref<8x32xf32, #tpu.memory_space<vmem>>, %arg2: memref<32x128xf32, #tpu.memory_space<vmem>>, %arg3: memref<1x128xf32, #tpu.memory_space<vmem>>, %arg4: memref<128x128xf32, #tpu.memory_space<vmem>>, %arg5: memref<1x128xf32, #tpu.memory_space<vmem>>, %arg6: memref<128x64xf32, #tpu.memory_space<vmem>>, %arg7: memref<1x64xf32, #tpu.memory_space<vmem>>, %arg8: memref<64x8xf32, #tpu.memory_space<vmem>>, %arg9: memref<1x8xf32, #tpu.memory_space<vmem>>, %arg10: memref<8x8xf32, #tpu.memory_space<vmem>>) attributes {dimension_semantics = [#tpu.dimension_semantics<parallel>], iteration_bounds = array<i64: 1>, scalar_prefetch = 0 : i64, scratch_operands = 0 : i64, tpu.core_type = #tpu.core_type<tc>, window_params = [{transform_indices = @transform_0, window_bounds = array<i64: 8, 32>}, {pipeline_mode = #tpu.pipeline_mode<synchronous>, transform_indices = @transform_1, window_bounds = array<i64: 32, 128>}, {pipeline_mode = #tpu.pipeline_mode<synchronous>, transform_indices = @transform_2, window_bounds = array<i64: 1, 128>}, {pipeline_mode = #tpu.pipeline_mode<synchronous>, transform_indices = @transform_3, window_bounds = array<i64: 128, 128>}, {pipeline_mode = #tpu.pipeline_mode<synchronous>, transform_indices = @transform_4, window_bounds = array<i64: 1, 128>}, {pipeline_mode = #tpu.pipeline_mode<synchronous>, transform_indices = @transform_5, window_bounds = array<i64: 128, 64>}, {pipeline_mode = #tpu.pipeline_mode<synchronous>, transform_indices = @transform_6, window_bounds = array<i64: 1, 64>}, {pipeline_mode = #tpu.pipeline_mode<synchronous>, transform_indices = @transform_7, window_bounds = array<i64: 64, 8>}, {pipeline_mode = #tpu.pipeline_mode<synchronous>, transform_indices = @transform_8, window_bounds = array<i64: 1, 8>}, {transform_indices = @transform_9, window_bounds = array<i64: 8, 8>}]} {
    %c0 = arith.constant 0 : index
    %c0_0 = arith.constant 0 : index
    %0 = vector.load %arg1[%c0, %c0_0] : memref<8x32xf32, #tpu.memory_space<vmem>>, vector<8x32xf32>
    %c0_1 = arith.constant 0 : index
    %c0_2 = arith.constant 0 : index
    %1 = vector.load %arg2[%c0_1, %c0_2] : memref<32x128xf32, #tpu.memory_space<vmem>>, vector<32x128xf32>
    %cst = arith.constant dense<0.000000e+00> : vector<8x128xf32>
    %2 = tpu.matmul %0, %1, %cst {dimension_numbers = #tpu.dot_dimension_numbers<[1], [0], [0], [1], [0, 0, 1, 1], [], []>} : vector<8x32xf32>, vector<32x128xf32>, vector<8x128xf32> -> vector<8x128xf32>
    %c0_3 = arith.constant 0 : index
    %c0_4 = arith.constant 0 : index
    %3 = vector.load %arg3[%c0_3, %c0_4] : memref<1x128xf32, #tpu.memory_space<vmem>>, vector<1x128xf32>
    %4 = vector.broadcast %3 : vector<1x128xf32> to vector<8x128xf32>
    %5 = arith.addf %2, %4 : vector<8x128xf32>
    %cst_5 = arith.constant 0.000000e+00 : f32
    %6 = vector.broadcast %cst_5 : f32 to vector<8x128xf32>
    %7 = arith.maximumf %5, %6 : vector<8x128xf32>
    %c0_6 = arith.constant 0 : index
    %c0_7 = arith.constant 0 : index
    %8 = vector.load %arg4[%c0_6, %c0_7] : memref<128x128xf32, #tpu.memory_space<vmem>>, vector<128x128xf32>
    %cst_8 = arith.constant dense<0.000000e+00> : vector<8x128xf32>
    %9 = tpu.matmul %7, %8, %cst_8 {dimension_numbers = #tpu.dot_dimension_numbers<[1], [0], [0], [1], [0, 0, 1, 1], [], []>} : vector<8x128xf32>, vector<128x128xf32>, vector<8x128xf32> -> vector<8x128xf32>
    %c0_9 = arith.constant 0 : index
    %c0_10 = arith.constant 0 : index
    %10 = vector.load %arg5[%c0_9, %c0_10] : memref<1x128xf32, #tpu.memory_space<vmem>>, vector<1x128xf32>
    %11 = vector.broadcast %10 : vector<1x128xf32> to vector<8x128xf32>
    %12 = arith.addf %9, %11 : vector<8x128xf32>
    %cst_11 = arith.constant 0.000000e+00 : f32
    %13 = vector.broadcast %cst_11 : f32 to vector<8x128xf32>
    %14 = arith.maximumf %12, %13 : vector<8x128xf32>
    %c0_12 = arith.constant 0 : index
    %c0_13 = arith.constant 0 : index
    %15 = vector.load %arg6[%c0_12, %c0_13] : memref<128x64xf32, #tpu.memory_space<vmem>>, vector<128x64xf32>
    %cst_14 = arith.constant dense<0.000000e+00> : vector<8x64xf32>
    %16 = tpu.matmul %14, %15, %cst_14 {dimension_numbers = #tpu.dot_dimension_numbers<[1], [0], [0], [1], [0, 0, 1, 1], [], []>} : vector<8x128xf32>, vector<128x64xf32>, vector<8x64xf32> -> vector<8x64xf32>
    %c0_15 = arith.constant 0 : index
    %c0_16 = arith.constant 0 : index
    %17 = vector.load %arg7[%c0_15, %c0_16] : memref<1x64xf32, #tpu.memory_space<vmem>>, vector<1x64xf32>
    %18 = vector.broadcast %17 : vector<1x64xf32> to vector<8x64xf32>
    %19 = arith.addf %16, %18 : vector<8x64xf32>
    %cst_17 = arith.constant 0.000000e+00 : f32
    %20 = vector.broadcast %cst_17 : f32 to vector<8x64xf32>
    %21 = arith.maximumf %19, %20 : vector<8x64xf32>
    %c0_18 = arith.constant 0 : index
    %c0_19 = arith.constant 0 : index
    %22 = vector.load %arg8[%c0_18, %c0_19] : memref<64x8xf32, #tpu.memory_space<vmem>>, vector<64x8xf32>
    %cst_20 = arith.constant dense<0.000000e+00> : vector<8x8xf32>
    %23 = tpu.matmul %21, %22, %cst_20 {dimension_numbers = #tpu.dot_dimension_numbers<[1], [0], [0], [1], [0, 0, 1, 1], [], []>} : vector<8x64xf32>, vector<64x8xf32>, vector<8x8xf32> -> vector<8x8xf32>
    %c0_21 = arith.constant 0 : index
    %c0_22 = arith.constant 0 : index
    %24 = vector.load %arg9[%c0_21, %c0_22] : memref<1x8xf32, #tpu.memory_space<vmem>>, vector<1x8xf32>
    %25 = vector.broadcast %24 : vector<1x8xf32> to vector<8x8xf32>
    %26 = arith.addf %23, %25 : vector<8x8xf32>
    %27 = math.tanh %26 : vector<8x8xf32>
    %c0_23 = arith.constant 0 : index
    %c0_24 = arith.constant 0 : index
    %28 = vector.load %arg10[%c0_23, %c0_24] : memref<8x8xf32, #tpu.memory_space<vmem>>, vector<8x8xf32>
    tpu.vector_store %arg10[%c0_23, %c0_24], %27 {strides = array<i32>} : memref<8x8xf32, #tpu.memory_space<vmem>>, vector<8x8xf32>,
    return
  }
  func.func @transform_0(%arg0: i32) -> (i32, i32) {
    %c0_i32 = arith.constant 0 : i32
    %c0_i32_0 = arith.constant 0 : i32
    return %arg0, %c0_i32 : i32, i32
  }
  func.func @transform_1(%arg0: i32) -> (i32, i32) {
    %c0_i32 = arith.constant 0 : i32
    %c0_i32_0 = arith.constant 0 : i32
    %c0_i32_1 = arith.constant 0 : i32
    return %c0_i32, %c0_i32_0 : i32, i32
  }
  func.func @transform_2(%arg0: i32) -> (i32, i32) {
    %c0_i32 = arith.constant 0 : i32
    %c0_i32_0 = arith.constant 0 : i32
    %c0_i32_1 = arith.constant 0 : i32
    return %c0_i32, %c0_i32_0 : i32, i32
  }
  func.func @transform_3(%arg0: i32) -> (i32, i32) {
    %c0_i32 = arith.constant 0 : i32
    %c0_i32_0 = arith.constant 0 : i32
    %c0_i32_1 = arith.constant 0 : i32
    return %c0_i32, %c0_i32_0 : i32, i32
  }
  func.func @transform_4(%arg0: i32) -> (i32, i32) {
    %c0_i32 = arith.constant 0 : i32
    %c0_i32_0 = arith.constant 0 : i32
    %c0_i32_1 = arith.constant 0 : i32
    return %c0_i32, %c0_i32_0 : i32, i32
  }
  func.func @transform_5(%arg0: i32) -> (i32, i32) {
    %c0_i32 = arith.constant 0 : i32
    %c0_i32_0 = arith.constant 0 : i32
    %c0_i32_1 = arith.constant 0 : i32
    return %c0_i32, %c0_i32_0 : i32, i32
  }
  func.func @transform_6(%arg0: i32) -> (i32, i32) {
    %c0_i32 = arith.constant 0 : i32
    %c0_i32_0 = arith.constant 0 : i32
    %c0_i32_1 = arith.constant 0 : i32
    return %c0_i32, %c0_i32_0 : i32, i32
  }
  func.func @transform_7(%arg0: i32) -> (i32, i32) {
    %c0_i32 = arith.constant 0 : i32
    %c0_i32_0 = arith.constant 0 : i32
    %c0_i32_1 = arith.constant 0 : i32
    return %c0_i32, %c0_i32_0 : i32, i32
  }
  func.func @transform_8(%arg0: i32) -> (i32, i32) {
    %c0_i32 = arith.constant 0 : i32
    %c0_i32_0 = arith.constant 0 : i32
    %c0_i32_1 = arith.constant 0 : i32
    return %c0_i32, %c0_i32_0 : i32, i32
  }
  func.func @transform_9(%arg0: i32) -> (i32, i32) {
    %c0_i32 = arith.constant 0 : i32
    %c0_i32_0 = arith.constant 0 : i32
    return %arg0, %c0_i32 : i32, i32
  }
}

</mosaic_0001>

<llo_original>
// kernel: actor_forward.1
$region0: #{actor_forward.1}
  #allocation0 [shape = 'u32[]', space=smem, size = 0x4, offset = 0x4, fixed_abs, tag = 'smem constant byte address 0x4 - core index']
  #allocation1 [shape = 'u32[144,128]{1,0:T(1,128)}', space=vmem, size = 0x12000, scoped, tag = 'internal scratch']
  %s0 = inlined_call_operand.vmem [shape: f32[8,32], index: 0, kind: input, shape index: {}]
  %s1 = inlined_call_operand.vmem [shape: f32[32,128], index: 1, kind: input, shape index: {}]
  %s2 = inlined_call_operand.vmem [shape: f32[1,128], index: 2, kind: input, shape index: {}]
  %s3 = inlined_call_operand.vmem [shape: f32[128,128], index: 3, kind: input, shape index: {}]
  %s4 = inlined_call_operand.vmem [shape: f32[1,128], index: 4, kind: input, shape index: {}]
  %s5 = inlined_call_operand.vmem [shape: f32[128,64], index: 5, kind: input, shape index: {}]
  %s6 = inlined_call_operand.vmem [shape: f32[1,64], index: 6, kind: input, shape index: {}]
  %s7 = inlined_call_operand.vmem [shape: f32[64,8], index: 7, kind: input, shape index: {}]
  %s8 = inlined_call_operand.vmem [shape: f32[1,8], index: 8, kind: input, shape index: {}]
  %s9 = inlined_call_operand.hbm [shape: f32[8,8], index: 9, kind: output, shape index: {}]
  %s10 = sld [smem:[#allocation0]]
  $region46: #{actor_forward.1} parent=0
    _
  %s12 = ssub.s32 1, %s10
  %s13 = scalar_select 0, %s12, %s10
  $region1: #{actor_forward.1} parent=0
    #allocation2 [shape = 'u8[4096]{0}', space=vmem, size = 0x1000, scoped, tag = 'output window, operand 0, single buffered']
    #allocation3 [shape = 's32[1]{0}', space=sflag, size = 0x4, scoped, tag = 'scoped memory for actor_forward.1']
    %14 = vsyncpa [#allocation3], 0
    // Predicated region
    $region2: #{actor_forward.1} parent=1 // pred_check
      _
    $region3: #{actor_forward.1} parent=1 // pred_check_branch
      %16 = sbr.rel (0) target = $region5
    $region4: #{actor_forward.1} parent=1 // pred_region
      _
    $region5: #{actor_forward.1} parent=1 // pred_fallthru
      _
    // Predicated region
    $region6: #{actor_forward.1} parent=1 // pred_check
      _
    $region7: #{actor_forward.1} parent=1 // pred_check_branch
      %18 = sbr.rel (0) target = $region9
    $region8: #{actor_forward.1} parent=1 // pred_region
      _
    $region9: #{actor_forward.1} parent=1 // pred_fallthru
      _
    // Predicated region
    $region10: #{actor_forward.1} parent=1 // pred_check
      _
    $region11: #{actor_forward.1} parent=1 // pred_check_branch
      %20 = sbr.rel (0) target = $region13
    $region12: #{actor_forward.1} parent=1 // pred_region
      _
    $region13: #{actor_forward.1} parent=1 // pred_fallthru
      _
    // Predicated region
    $region14: #{actor_forward.1} parent=1 // pred_check
      _
    $region15: #{actor_forward.1} parent=1 // pred_check_branch
      %22 = sbr.rel (0) target = $region17
    $region16: #{actor_forward.1} parent=1 // pred_region
      _
    $region17: #{actor_forward.1} parent=1 // pred_fallthru
      _
    // Predicated region
    $region18: #{actor_forward.1} parent=1 // pred_check
      _
    $region19: #{actor_forward.1} parent=1 // pred_check_branch
      %24 = sbr.rel (0) target = $region21
    $region20: #{actor_forward.1} parent=1 // pred_region
      _
    $region21: #{actor_forward.1} parent=1 // pred_fallthru
      _
    // Predicated region
    $region22: #{actor_forward.1} parent=1 // pred_check
      _
    $region23: #{actor_forward.1} parent=1 // pred_check_branch
      %26 = sbr.rel (0) target = $region25
    $region24: #{actor_forward.1} parent=1 // pred_region
      _
    $region25: #{actor_forward.1} parent=1 // pred_fallthru
      _
    // Predicated region
    $region26: #{actor_forward.1} parent=1 // pred_check
      _
    $region27: #{actor_forward.1} parent=1 // pred_check_branch
      %28 = sbr.rel (0) target = $region29
    $region28: #{actor_forward.1} parent=1 // pred_region
      _
    $region29: #{actor_forward.1} parent=1 // pred_fallthru
      _
    // Predicated region
    $region30: #{actor_forward.1} parent=1 // pred_check
      _
    $region31: #{actor_forward.1} parent=1 // pred_check_branch
      %30 = sbr.rel (0) target = $region33
    $region32: #{actor_forward.1} parent=1 // pred_region
      _
    $region33: #{actor_forward.1} parent=1 // pred_fallthru
      _
    // Predicated region
    $region34: #{actor_forward.1} parent=1 // pred_check
      _
    $region35: #{actor_forward.1} parent=1 // pred_check_branch
      %32 = sbr.rel (0) target = $region37
    $region36: #{actor_forward.1} parent=1 // pred_region
      _
    $region37: #{actor_forward.1} parent=1 // pred_fallthru
      _
    %v33 = vld [vmem:[%s0] sm:$0xff]
    %v34 = vld [vmem:[%s1] sm:$0xff]
    %v35 = vld [vmem:[%s1 + $0x8] sm:$0xff]
    %v36 = vld [vmem:[%s1 + $0x10] sm:$0xff]
    %v37 = vld [vmem:[%s1 + $0x18] sm:$0xff]
    %v38 = vld [vmem:[%s2] sm:$0x1]
    %v40 = vlaneseq
    %v41 = vshrl.u32 %v40, 7
    %v42 = vsub.s32 0, %v41
    %v43 = vrot.slane %v38, %v42
    %vm45 = vcmask 261120
    %v47 = vsel %vm45, %v33, 0
    %49 = vmatprep.subr.mxu0 0.0
    %50 = vmatpush1.msra.mxu0 %v34
    %51 = vmatprep.subr.mxu0 0.0
    %52 = vmatpush1.msra.mxu0 %v35
    %53 = vmatprep.subr.mxu0 0.0
    %54 = vmatpush1.msra.mxu0 %v36
    %55 = vmatprep.subr.mxu0 0.0
    %56 = vmatpush1.msra.mxu0 %v37
    %57 = vmatprep.subr.mxu0 0.0
    %58 = vmatpush1.msra.mxu0 0.0
    %59 = vmatprep.subr.mxu0 0.0
    %60 = vmatpush1.msra.mxu0 0.0
    %61 = vmatprep.subr.mxu0 0.0
    %62 = vmatpush1.msra.mxu0 0.0
    %63 = vmatprep.subr.mxu0 0.0
    %64 = vmatpush1.msra.mxu0 0.0
    %65 = vmatprep.subr.mxu0 0.0
    %66 = vmatpush1.msra.mxu0 0.0
    %67 = vmatprep.subr.mxu0 0.0
    %68 = vmatpush1.msra.mxu0 0.0
    %69 = vmatprep.subr.mxu0 0.0
    %70 = vmatpush1.msra.mxu0 0.0
    %71 = vmatprep.subr.mxu0 0.0
    %72 = vmatpush1.msra.mxu0 0.0
    %73 = vmatprep.subr.mxu0 0.0
    %74 = vmatpush1.msra.mxu0 0.0
    %75 = vmatprep.subr.mxu0 0.0
    %76 = vmatpush1.msra.mxu0 0.0
    %77 = vmatprep.subr.mxu0 0.0
    %78 = vmatpush1.msra.mxu0 0.0
    %79 = vmatprep.subr.mxu0 0.0
    %80 = vmatpush1.msra.mxu0 0.0
    %81 = vmatprep.subr.mxu0 0.0
    %82 = vmatpush1.msra.mxu0 0.0
    %83 = vmatprep.subr.mxu0 0.0
    %84 = vmatpush1.msra.mxu0 0.0
    %85 = vmatprep.subr.mxu0 0.0
    %86 = vmatpush1.msra.mxu0 0.0
    %87 = vmatprep.subr.mxu0 0.0
    %88 = vmatpush1.msra.mxu0 0.0
    %89 = vmatprep.subr.mxu0 0.0
    %90 = vmatpush1.msra.mxu0 0.0
    %91 = vmatprep.subr.mxu0 0.0
    %92 = vmatpush1.msra.mxu0 0.0
    %93 = vmatprep.subr.mxu0 0.0
    %94 = vmatpush1.msra.mxu0 0.0
    %95 = vmatprep.subr.mxu0 0.0
    %96 = vmatpush1.msra.mxu0 0.0
    %97 = vmatprep.subr.mxu0 0.0
    %98 = vmatpush1.msra.mxu0 0.0
    %99 = vmatprep.subr.mxu0 0.0
    %100 = vmatpush1.msra.mxu0 0.0
    %101 = vmatprep.subr.mxu0 0.0
    %102 = vmatpush1.msra.mxu0 0.0
    %103 = vmatprep.subr.mxu0 0.0
    %104 = vmatpush1.msra.mxu0 0.0
    %105 = vmatprep.subr.mxu0 0.0
    %106 = vmatpush1.msra.mxu0 0.0
    %107 = vmatprep.subr.mxu0 0.0
    %108 = vmatpush1.msra.mxu0 0.0
    %109 = vmatprep.subr.mxu0 0.0
    %110 = vmatpush1.msra.mxu0 0.0
    %111 = vmatprep.subr.mxu0 0.0
    %112 = vmatpush1.msra.mxu0 0.0
    %113 = vmatprep.mubr.f32.mxu0 0.0
    %114 = vmatmul.mubr.f32.gmra.mrb[0].mxu0 %v47
    %v115 = vpop.f32.mrb[0].mxu0
    %v116 = vadd.f32 %v43, %v115
    %v117 = vpop.f32.mrb[0].mxu0
    %118 = vdwg.mxu0
    %v119 = vmax.f32 %v116, 0.0
    %v120 = vld [vmem:[%s3] sm:$0xff]
    %v121 = vld [vmem:[%s3 + $0x8] sm:$0xff]
    %v122 = vld [vmem:[%s3 + $0x10] sm:$0xff]
    %v123 = vld [vmem:[%s3 + $0x18] sm:$0xff]
    %v124 = vld [vmem:[%s3 + $0x20] sm:$0xff]
    %v125 = vld [vmem:[%s3 + $0x28] sm:$0xff]
    %v126 = vld [vmem:[%s3 + $0x30] sm:$0xff]
    %v127 = vld [vmem:[%s3 + $0x38] sm:$0xff]
    %v128 = vld [vmem:[%s3 + $0x40] sm:$0xff]
    %v129 = vld [vmem:[%s3 + $0x48] sm:$0xff]
    %v130 = vld [vmem:[%s3 + $0x50] sm:$0xff]
    %v131 = vld [vmem:[%s3 + $0x58] sm:$0xff]
    %v132 = vld [vmem:[%s3 + $0x60] sm:$0xff]
    %v133 = vld [vmem:[%s3 + $0x68] sm:$0xff]
    %v134 = vld [vmem:[%s3 + $0x70] sm:$0xff]
    %v135 = vld [vmem:[%s3 + $0x78] sm:$0xff]
    %v136 = vld [vmem:[%s4] sm:$0x1]
    %v138 = vlaneseq
    %v139 = vshrl.u32 %v138, 7
    %v140 = vsub.s32 0, %v139
    %v141 = vrot.slane %v136, %v140
    %143 = vmatprep.subr.mxu0 0.0
    %144 = vmatpush1.msra.mxu0 %v120
    %145 = vmatprep.subr.mxu0 0.0
    %146 = vmatpush1.msra.mxu0 %v121
    %147 = vmatprep.subr.mxu0 0.0
    %148 = vmatpush1.msra.mxu0 %v122
    %149 = vmatprep.subr.mxu0 0.0
    %150 = vmatpush1.msra.mxu0 %v123
    %151 = vmatprep.subr.mxu0 0.0
    %152 = vmatpush1.msra.mxu0 %v124
    %153 = vmatprep.subr.mxu0 0.0
    %154 = vmatpush1.msra.mxu0 %v125
    %155 = vmatprep.subr.mxu0 0.0
    %156 = vmatpush1.msra.mxu0 %v126
    %157 = vmatprep.subr.mxu0 0.0
    %158 = vmatpush1.msra.mxu0 %v127
    %159 = vmatprep.subr.mxu0 0.0
    %160 = vmatpush1.msra.mxu0 %v128
    %161 = vmatprep.subr.mxu0 0.0
    %162 = vmatpush1.msra.mxu0 %v129
    %163 = vmatprep.subr.mxu0 0.0
    %164 = vmatpush1.msra.mxu0 %v130
    %165 = vmatprep.subr.mxu0 0.0
    %166 = vmatpush1.msra.mxu0 %v131
    %167 = vmatprep.subr.mxu0 0.0
    %168 = vmatpush1.msra.mxu0 %v132
    %169 = vmatprep.subr.mxu0 0.0
    %170 = vmatpush1.msra.mxu0 %v133
    %171 = vmatprep.subr.mxu0 0.0
    %172 = vmatpush1.msra.mxu0 %v134
    %173 = vmatprep.subr.mxu0 0.0
    %174 = vmatpush1.msra.mxu0 %v135
    %175 = vmatprep.subr.mxu0 0.0
    %176 = vmatpush1.msra.mxu0 0.0
    %177 = vmatprep.subr.mxu0 0.0
    %178 = vmatpush1.msra.mxu0 0.0
    %179 = vmatprep.subr.mxu0 0.0
    %180 = vmatpush1.msra.mxu0 0.0
    %181 = vmatprep.subr.mxu0 0.0
    %182 = vmatpush1.msra.mxu0 0.0
    %183 = vmatprep.subr.mxu0 0.0
    %184 = vmatpush1.msra.mxu0 0.0
    %185 = vmatprep.subr.mxu0 0.0
    %186 = vmatpush1.msra.mxu0 0.0
    %187 = vmatprep.subr.mxu0 0.0
    %188 = vmatpush1.msra.mxu0 0.0
    %189 = vmatprep.subr.mxu0 0.0
    %190 = vmatpush1.msra.mxu0 0.0
    %191 = vmatprep.subr.mxu0 0.0
    %192 = vmatpush1.msra.mxu0 0.0
    %193 = vmatprep.subr.mxu0 0.0
    %194 = vmatpush1.msra.mxu0 0.0
    %195 = vmatprep.subr.mxu0 0.0
    %196 = vmatpush1.msra.mxu0 0.0
    %197 = vmatprep.subr.mxu0 0.0
    %198 = vmatpush1.msra.mxu0 0.0
    %199 = vmatprep.subr.mxu0 0.0
    %200 = vmatpush1.msra.mxu0 0.0
    %201 = vmatprep.subr.mxu0 0.0
    %202 = vmatpush1.msra.mxu0 0.0
    %203 = vmatprep.subr.mxu0 0.0
    %204 = vmatpush1.msra.mxu0 0.0
    %205 = vmatprep.subr.mxu0 0.0
    %206 = vmatpush1.msra.mxu0 0.0
    %207 = vmatprep.mubr.f32.mxu0 0.0
    %208 = vmatmul.mubr.f32.gmra.mrb[0].mxu0 %v119
    %v209 = vpop.f32.mrb[0].mxu0
    %v210 = vadd.f32 %v141, %v209
    %v211 = vpop.f32.mrb[0].mxu0
    %212 = vdwg.mxu0
    %v213 = vmax.f32 %v210, 0.0
    %v214 = vld [vmem:[%s5] sm:$0xff]
    %v215 = vld [vmem:[%s5 + $0x8] sm:$0xff]
    %v216 = vld [vmem:[%s5 + $0x10] sm:$0xff]
    %v217 = vld [vmem:[%s5 + $0x18] sm:$0xff]
    %v218 = vld [vmem:[%s5 + $0x20] sm:$0xff]
    %v219 = vld [vmem:[%s5 + $0x28] sm:$0xff]
    %v220 = vld [vmem:[%s5 + $0x30] sm:$0xff]
    %v221 = vld [vmem:[%s5 + $0x38] sm:$0xff]
    %v222 = vld [vmem:[%s5 + $0x40] sm:$0xff]
    %v223 = vld [vmem:[%s5 + $0x48] sm:$0xff]
    %v224 = vld [vmem:[%s5 + $0x50] sm:$0xff]
    %v225 = vld [vmem:[%s5 + $0x58] sm:$0xff]
    %v226 = vld [vmem:[%s5 + $0x60] sm:$0xff]
    %v227 = vld [vmem:[%s5 + $0x68] sm:$0xff]
    %v228 = vld [vmem:[%s5 + $0x70] sm:$0xff]
    %v229 = vld [vmem:[%s5 + $0x78] sm:$0xff]
    %v230 = vld [vmem:[%s6] sm:$0x1]
    %v232 = vlaneseq
    %v233 = vshrl.u32 %v232, 7
    %v234 = vsub.s32 0, %v233
    %v235 = vrot.slane %v230, %v234
    %237 = vmatprep.subr.mxu0 0.0
    %238 = vmatpush1.msra.mxu0 %v214
    %239 = vmatprep.subr.mxu0 0.0
    %240 = vmatpush1.msra.mxu0 %v215
    %241 = vmatprep.subr.mxu0 0.0
    %242 = vmatpush1.msra.mxu0 %v216
    %243 = vmatprep.subr.mxu0 0.0
    %244 = vmatpush1.msra.mxu0 %v217
    %245 = vmatprep.subr.mxu0 0.0
    %246 = vmatpush1.msra.mxu0 %v218
    %247 = vmatprep.subr.mxu0 0.0
    %248 = vmatpush1.msra.mxu0 %v219
    %249 = vmatprep.subr.mxu0 0.0
    %250 = vmatpush1.msra.mxu0 %v220
    %251 = vmatprep.subr.mxu0 0.0
    %252 = vmatpush1.msra.mxu0 %v221
    %253 = vmatprep.subr.mxu0 0.0
    %254 = vmatpush1.msra.mxu0 %v222
    %255 = vmatprep.subr.mxu0 0.0
    %256 = vmatpush1.msra.mxu0 %v223
    %257 = vmatprep.subr.mxu0 0.0
    %258 = vmatpush1.msra.mxu0 %v224
    %259 = vmatprep.subr.mxu0 0.0
    %260 = vmatpush1.msra.mxu0 %v225
    %261 = vmatprep.subr.mxu0 0.0
    %262 = vmatpush1.msra.mxu0 %v226
    %263 = vmatprep.subr.mxu0 0.0
    %264 = vmatpush1.msra.mxu0 %v227
    %265 = vmatprep.subr.mxu0 0.0
    %266 = vmatpush1.msra.mxu0 %v228
    %267 = vmatprep.subr.mxu0 0.0
    %268 = vmatpush1.msra.mxu0 %v229
    %269 = vmatprep.subr.mxu0 0.0
    %270 = vmatpush1.msra.mxu0 0.0
    %271 = vmatprep.subr.mxu0 0.0
    %272 = vmatpush1.msra.mxu0 0.0
    %273 = vmatprep.subr.mxu0 0.0
    %274 = vmatpush1.msra.mxu0 0.0
    %275 = vmatprep.subr.mxu0 0.0
    %276 = vmatpush1.msra.mxu0 0.0
    %277 = vmatprep.subr.mxu0 0.0
    %278 = vmatpush1.msra.mxu0 0.0
    %279 = vmatprep.subr.mxu0 0.0
    %280 = vmatpush1.msra.mxu0 0.0
    %281 = vmatprep.subr.mxu0 0.0
    %282 = vmatpush1.msra.mxu0 0.0
    %283 = vmatprep.subr.mxu0 0.0
    %284 = vmatpush1.msra.mxu0 0.0
    %285 = vmatprep.subr.mxu0 0.0
    %286 = vmatpush1.msra.mxu0 0.0
    %287 = vmatprep.subr.mxu0 0.0
    %288 = vmatpush1.msra.mxu0 0.0
    %289 = vmatprep.subr.mxu0 0.0
    %290 = vmatpush1.msra.mxu0 0.0
    %291 = vmatprep.subr.mxu0 0.0
    %292 = vmatpush1.msra.mxu0 0.0
    %293 = vmatprep.subr.mxu0 0.0
    %294 = vmatpush1.msra.mxu0 0.0
    %295 = vmatprep.subr.mxu0 0.0
    %296 = vmatpush1.msra.mxu0 0.0
    %297 = vmatprep.subr.mxu0 0.0
    %298 = vmatpush1.msra.mxu0 0.0
    %299 = vmatprep.subr.mxu0 0.0
    %300 = vmatpush1.msra.mxu0 0.0
    %301 = vmatprep.mubr.f32.mxu0 0.0
    %302 = vmatmul.mubr.f32.gmra.mrb[0].mxu0 %v213
    %v303 = vpop.f32.mrb[0].mxu0
    %v304 = vadd.f32 %v235, %v303
    %v305 = vpop.f32.mrb[0].mxu0
    %306 = vdwg.mxu0
    %v307 = vmax.f32 %v304, 0.0
    %v308 = vld [vmem:[%s7] sm:$0xff]
    %v309 = vld [vmem:[%s7 + $0x8] sm:$0xff]
    %v310 = vld [vmem:[%s7 + $0x10] sm:$0xff]
    %v311 = vld [vmem:[%s7 + $0x18] sm:$0xff]
    %v312 = vld [vmem:[%s7 + $0x20] sm:$0xff]
    %v313 = vld [vmem:[%s7 + $0x28] sm:$0xff]
    %v314 = vld [vmem:[%s7 + $0x30] sm:$0xff]
    %v315 = vld [vmem:[%s7 + $0x38] sm:$0xff]
    %v316 = vld [vmem:[%s8] sm:$0x1]
    %v318 = vlaneseq
    %v319 = vshrl.u32 %v318, 7
    %v320 = vsub.s32 0, %v319
    %v321 = vrot.slane %v316, %v320
    %vm323 = vcmask 523264
    %v325 = vsel %vm323, %v307, 0
    %327 = vmatprep.subr.mxu0 0.0
    %328 = vmatpush1.msra.mxu0 %v308
    %329 = vmatprep.subr.mxu0 0.0
    %330 = vmatpush1.msra.mxu0 %v309
    %331 = vmatprep.subr.mxu0 0.0
    %332 = vmatpush1.msra.mxu0 %v310
    %333 = vmatprep.subr.mxu0 0.0
    %334 = vmatpush1.msra.mxu0 %v311
    %335 = vmatprep.subr.mxu0 0.0
    %336 = vmatpush1.msra.mxu0 %v312
    %337 = vmatprep.subr.mxu0 0.0
    %338 = vmatpush1.msra.mxu0 %v313
    %339 = vmatprep.subr.mxu0 0.0
    %340 = vmatpush1.msra.mxu0 %v314
    %341 = vmatprep.subr.mxu0 0.0
    %342 = vmatpush1.msra.mxu0 %v315
    %343 = vmatprep.subr.mxu0 0.0
    %344 = vmatpush1.msra.mxu0 0.0
    %345 = vmatprep.subr.mxu0 0.0
    %346 = vmatpush1.msra.mxu0 0.0
    %347 = vmatprep.subr.mxu0 0.0
    %348 = vmatpush1.msra.mxu0 0.0
    %349 = vmatprep.subr.mxu0 0.0
    %350 = vmatpush1.msra.mxu0 0.0
    %351 = vmatprep.subr.mxu0 0.0
    %352 = vmatpush1.msra.mxu0 0.0
    %353 = vmatprep.subr.mxu0 0.0
    %354 = vmatpush1.msra.mxu0 0.0
    %355 = vmatprep.subr.mxu0 0.0
    %356 = vmatpush1.msra.mxu0 0.0
    %357 = vmatprep.subr.mxu0 0.0
    %358 = vmatpush1.msra.mxu0 0.0
    %359 = vmatprep.subr.mxu0 0.0
    %360 = vmatpush1.msra.mxu0 0.0
    %361 = vmatprep.subr.mxu0 0.0
    %362 = vmatpush1.msra.mxu0 0.0
    %363 = vmatprep.subr.mxu0 0.0
    %364 = vmatpush1.msra.mxu0 0.0
    %365 = vmatprep.subr.mxu0 0.0
    %366 = vmatpush1.msra.mxu0 0.0
    %367 = vmatprep.subr.mxu0 0.0
    %368 = vmatpush1.msra.mxu0 0.0
    %369 = vmatprep.subr.mxu0 0.0
    %370 = vmatpush1.msra.mxu0 0.0
    %371 = vmatprep.subr.mxu0 0.0
    %372 = vmatpush1.msra.mxu0 0.0
    %373 = vmatprep.subr.mxu0 0.0
    %374 = vmatpush1.msra.mxu0 0.0
    %375 = vmatprep.subr.mxu0 0.0
    %376 = vmatpush1.msra.mxu0 0.0
    %377 = vmatprep.subr.mxu0 0.0
    %378 = vmatpush1.msra.mxu0 0.0
    %379 = vmatprep.subr.mxu0 0.0
    %380 = vmatpush1.msra.mxu0 0.0
    %381 = vmatprep.subr.mxu0 0.0
    %382 = vmatpush1.msra.mxu0 0.0
    %383 = vmatprep.subr.mxu0 0.0
    %384 = vmatpush1.msra.mxu0 0.0
    %385 = vmatprep.subr.mxu0 0.0
    %386 = vmatpush1.msra.mxu0 0.0
    %387 = vmatprep.subr.mxu0 0.0
    %388 = vmatpush1.msra.mxu0 0.0
    %389 = vmatprep.subr.mxu0 0.0
    %390 = vmatpush1.msra.mxu0 0.0
    %391 = vmatprep.mubr.f32.mxu0 0.0
    %392 = vmatmul.mubr.f32.gmra.mrb[0].mxu0 %v325
    %v393 = vpop.f32.mrb[0].mxu0
    %v394 = vadd.f32 %v321, %v393
    %v395 = vpop.f32.mrb[0].mxu0
    %396 = vdwg.mxu0
    %v397 = vtanh.pop %v394
    %vm398 = vcmask 64512
    %399 = vst.msk [vmem:[#allocation2] sm:$0xff] %vm398, %v397
    // Predicated region
    $region38: #{actor_forward.1} parent=1 // pred_check
      _
    $region39: #{actor_forward.1} parent=1 // pred_check_branch
      %401 = sbr.rel (0) target = $region41
    $region40: #{actor_forward.1} parent=1 // pred_region
      %s403 = ssub.s32 128, 128
      %404 = vsyncadd [#allocation3], %s403
      %s406 = sshll.u32 [#allocation2], 4
      %s407 = int_to_ptr.vmem [resolvable:$true] %s406
      %409 = dma.vmem_to_hbm [thread:$0]  %s407, 128, %s9, [#allocation3]
    $region41: #{actor_forward.1} parent=1 // pred_fallthru
      _
    // Predicated region
    $region42: #{actor_forward.1} parent=1 // pred_check
      _
    $region43: #{actor_forward.1} parent=1 // pred_check_branch
      %411 = sbr.rel (0) target = $region45
    $region44: #{actor_forward.1} parent=1 // pred_region
      %412 = dma.done [#allocation3], 128
    $region45: #{actor_forward.1} parent=1 // pred_fallthru
      _
    %413 = vsyncpa [#allocation3], 1

</llo_original>
